<compile_context>
chip_gen: v7x
topology: tpu7x:2x2x1
jax: 0.10.0
libtpu: 0.0.40
codegen_flags: <defaults>
</compile_context>

<pallas_src>
import functools

import jax
import jax.numpy as jnp
from jax.experimental import pallas as pl
from jax.experimental.pallas import tpu as pltpu


def rotary_embedding_forward(seq_len, dim):
    """Mirrors RotaryEmbedding.forward: returns (seq_len, dim) = cat(freqs, freqs).

    Tiny table build -- kept in plain JAX (not worth a kernel)."""
    inv_freq = 1.0 / (10000.0 ** (jnp.arange(0, dim, 2, dtype=jnp.float32) / dim))
    t = jnp.arange(seq_len, dtype=jnp.float32)
    freqs = t[:, None] * inv_freq[None, :]                # (seq_len, dim // 2)
    return jnp.concatenate([freqs, freqs], axis=-1)       # (seq_len, dim)


def _rope_kernel(x_ref, cos_ref, sin_ref, o_ref, *, half, head_dim):
    """out = x * [cos|cos] + partner(x) * [-sin|+sin], per (seq-block, batch) tile.

    x_ref / o_ref : (tN, H, head_dim)   current tile
    cos_ref       : (tN, 1, head_dim)   f32, cos duplicated onto both halves
    sin_ref       : (tN, 1, head_dim)   f32, [-sin, +sin]
    """
    x = x_ref[...].astype(jnp.float32)
    # Cyclic roll by `half` *within the head axis*: every lane lands on the
    # other element of its rotation pair (x2 for the first half, x1 for the
    # second). Wrap-around is exactly the right data, so no masking needed.
    if head_dim % 128 == 0:
        partner = pltpu.roll(x, half, axis=2)     # XLU lane rotate (vreg-confined)
    else:
        partner = jnp.roll(x, half, axis=2)       # slice+concat lowering (portable)
    # (tN, 1, hd) coefficient tables broadcast over the H (sublane) axis.
    out = x * cos_ref[...] + partner * sin_ref[...]
    o_ref[...] = out.astype(o_ref.dtype)


def _pick_rows(N, H, head_dim, itemsize, target_bytes=2 << 20):
    """Seq rows per block targeting ~2 MiB x-blocks (past the HBM-roofline plateau)."""
    rows = max(1, target_bytes // max(1, H * head_dim * itemsize))
    if rows >= N:
        return N
    rows = max(8, (rows // 8) * 8)
    r = rows
    while r >= 8:                      # prefer a divisor of N (no ragged tail)
        if N % r == 0:
            return r
        r -= 8
    return rows                        # ragged tail is handled by Pallas anyway


def apply_rotary(x, rope_emb, *, seq_block_rows=None, donate=False):
    """Pallas TPU version of RotaryEmbedding.apply_rotary.

    x:        (B, N, H, head_dim)
    rope_emb: (N, head_dim)  -- output of rotary_embedding_forward(N, head_dim)
    """
    B, N, H, hd = x.shape
    half = hd // 2
    if hd != 2 * half:
        # TODO(synk): odd head_dim tail passthrough not implemented in-kernel.
        raise NotImplementedError("odd head_dim not supported")
    if rope_emb.shape != (N, hd):
        raise ValueError(f"rope_emb must have shape ({N}, {hd}), got {rope_emb.shape}")

    # ---- tiny coefficient tables (B*H times smaller than x traffic) ----
    emb32 = rope_emb.astype(jnp.float32)
    sin = emb32[:, :half]                                  # (N, half)
    cos = emb32[:, half:2 * half]                          # (N, half)
    cos_tab = jnp.concatenate([cos, cos], axis=-1)[:, None, :]    # (N, 1, hd)
    sin_tab = jnp.concatenate([-sin, sin], axis=-1)[:, None, :]   # (N, 1, hd)

    itemsize = x.dtype.itemsize
    if seq_block_rows is None:
        seq_block_rows = _pick_rows(N, H, hd, itemsize)
    tN = int(min(seq_block_rows, N))
    grid = (pl.cdiv(N, tN), B)          # seq blocks outer, batch inner
                                        # (coef blocks stay resident across batch)

    # VMEM budget: double-buffered x & out blocks, double-buffered coef blocks,
    # plus in-kernel f32 temporaries (upcast x, partner, product) and slack.
    x_blk_bytes = tN * H * hd * itemsize
    coef_blk_bytes = tN * hd * 4
    vmem_need = (2 * 2 * x_blk_bytes + 2 * 2 * coef_blk_bytes
                 + 3 * tN * H * hd * 4 + (2 << 20))
    vmem_limit = int(min(max(vmem_need, 16 << 20), 48 << 20))   # < v7x 64 MiB

    x_spec = pl.BlockSpec((None, tN, H, hd), lambda j, b: (b, j, 0, 0))
    coef_spec = pl.BlockSpec((tN, 1, hd), lambda j, b: (j, 0, 0))

    out = pl.pallas_call(
        functools.partial(_rope_kernel, half=half, head_dim=hd),
        out_shape=jax.ShapeDtypeStruct((B, N, H, hd), x.dtype),
        grid=grid,
        in_specs=[x_spec, coef_spec, coef_spec],
        out_specs=x_spec,
        input_output_aliases=({0: 0} if donate else {}),
        compiler_params=pltpu.CompilerParams(
            dimension_semantics=("parallel", "parallel"),
            vmem_limit_bytes=vmem_limit,
        ),
    )(x, cos_tab, sin_tab)
    return out


# ---------------- pure-JAX reference (mirrors the PyTorch static method) -----
def apply_rotary_ref(x, rope_emb):
    head_dim = x.shape[-1]
    half = head_dim // 2
    x1 = x[..., :half]
    x2 = x[..., half:2 * half]
    sin = rope_emb[:, :half][None, :, None, :]
    cos = rope_emb[:, half:2 * half][None, :, None, :]
    r1 = x1 * cos - x2 * sin
    r2 = x1 * sin + x2 * cos
    return jnp.concatenate([r1, r2], axis=-1)


if __name__ == "__main__":
    B, N, H, hd = 2, 8, 4, 8          # batch, seq, heads, head_dim
    key = jax.random.PRNGKey(0)
    x = jax.random.normal(key, (B, N, H, hd), dtype=jnp.float32)

    rope_emb = rotary_embedding_forward(N, hd)     # module.forward(seq_len)
    out = jax.block_until_ready(apply_rotary(x, rope_emb))

    ref = jax.block_until_ready(apply_rotary_ref(x, rope_emb))
    assert out.shape == (B, N, H, hd)
    assert jnp.allclose(out, ref, atol=1e-5, rtol=1e-5), (
        float(jnp.max(jnp.abs(out - ref))))
    print("KERNEL_OK")
</pallas_src>

<mosaic_0001>
module attributes {stable_mosaic.version = 11 : i64} {
  func.func @_rope_kernel(%arg0: i32, %arg1: i32, %arg2: memref<1x8x4x8xf32, #tpu.memory_space<vmem>>, %arg3: memref<8x1x8xf32, #tpu.memory_space<vmem>>, %arg4: memref<8x1x8xf32, #tpu.memory_space<vmem>>, %arg5: memref<1x8x4x8xf32, #tpu.memory_space<vmem>>) attributes {dimension_semantics = [#tpu.dimension_semantics<parallel>, #tpu.dimension_semantics<parallel>], iteration_bounds = array<i64: 1, 2>, scalar_prefetch = 0 : i64, scratch_operands = 0 : i64, tpu.core_type = #tpu.core_type<tc>, window_params = [{transform_indices = @transform_0, window_bounds = array<i64: 1, 8, 4, 8>}, {transform_indices = @transform_1, window_bounds = array<i64: 8, 1, 8>}, {transform_indices = @transform_2, window_bounds = array<i64: 8, 1, 8>}, {transform_indices = @transform_3, window_bounds = array<i64: 1, 8, 4, 8>}]} {
    %c0 = arith.constant 0 : index
    %c0_0 = arith.constant 0 : index
    %c0_1 = arith.constant 0 : index
    %c0_2 = arith.constant 0 : index
    %0 = vector.load %arg2[%c0, %c0_0, %c0_1, %c0_2] : memref<1x8x4x8xf32, #tpu.memory_space<vmem>>, vector<1x8x4x8xf32>
    %1 = vector.shape_cast %0 : vector<1x8x4x8xf32> to vector<8x4x8xf32>
    %2 = vector.extract_strided_slice %1 {offsets = [0, 0, 4], sizes = [8, 4, 4], strides = [1, 1, 1]} : vector<8x4x8xf32> to vector<8x4x4xf32>
    %3 = vector.extract_strided_slice %1 {offsets = [0, 0, 0], sizes = [8, 4, 4], strides = [1, 1, 1]} : vector<8x4x8xf32> to vector<8x4x4xf32>
    %4 = tpu.concatenate %2, %3 in 2 : vector<8x4x4xf32>, vector<8x4x4xf32> -> vector<8x4x8xf32>
    %c0_3 = arith.constant 0 : index
    %c0_4 = arith.constant 0 : index
    %c0_5 = arith.constant 0 : index
    %5 = vector.load %arg3[%c0_3, %c0_4, %c0_5] : memref<8x1x8xf32, #tpu.memory_space<vmem>>, vector<8x1x8xf32>
    %6 = vector.broadcast %5 : vector<8x1x8xf32> to vector<8x4x8xf32>
    %7 = arith.mulf %1, %6 : vector<8x4x8xf32>
    %c0_6 = arith.constant 0 : index
    %c0_7 = arith.constant 0 : index
    %c0_8 = arith.constant 0 : index
    %8 = vector.load %arg4[%c0_6, %c0_7, %c0_8] : memref<8x1x8xf32, #tpu.memory_space<vmem>>, vector<8x1x8xf32>
    %9 = vector.broadcast %8 : vector<8x1x8xf32> to vector<8x4x8xf32>
    %10 = arith.mulf %4, %9 : vector<8x4x8xf32>
    %11 = arith.addf %7, %10 : vector<8x4x8xf32>
    %c0_9 = arith.constant 0 : index
    %c0_10 = arith.constant 0 : index
    %c0_11 = arith.constant 0 : index
    %c0_12 = arith.constant 0 : index
    %12 = vector.load %arg5[%c0_9, %c0_10, %c0_11, %c0_12] : memref<1x8x4x8xf32, #tpu.memory_space<vmem>>, vector<1x8x4x8xf32>
    %13 = vector.shape_cast %12 : vector<1x8x4x8xf32> to vector<8x4x8xf32>
    %14 = vector.shape_cast %11 : vector<8x4x8xf32> to vector<1x8x4x8xf32>
    tpu.vector_store %arg5[%c0_9, %c0_10, %c0_11, %c0_12], %14 {strides = array<i32>} : memref<1x8x4x8xf32, #tpu.memory_space<vmem>>, vector<1x8x4x8xf32>,
    return
  }
  func.func @transform_0(%arg0: i32, %arg1: i32) -> (i32, i32, i32, i32) {
    %c0_i32 = arith.constant 0 : i32
    %c0_i32_0 = arith.constant 0 : i32
    %c0_i32_1 = arith.constant 0 : i32
    return %arg1, %arg0, %c0_i32, %c0_i32_0 : i32, i32, i32, i32
  }
  func.func @transform_1(%arg0: i32, %arg1: i32) -> (i32, i32, i32) {
    %c0_i32 = arith.constant 0 : i32
    %c0_i32_0 = arith.constant 0 : i32
    %c0_i32_1 = arith.constant 0 : i32
    return %arg0, %c0_i32, %c0_i32_0 : i32, i32, i32
  }
  func.func @transform_2(%arg0: i32, %arg1: i32) -> (i32, i32, i32) {
    %c0_i32 = arith.constant 0 : i32
    %c0_i32_0 = arith.constant 0 : i32
    %c0_i32_1 = arith.constant 0 : i32
    return %arg0, %c0_i32, %c0_i32_0 : i32, i32, i32
  }
  func.func @transform_3(%arg0: i32, %arg1: i32) -> (i32, i32, i32, i32) {
    %c0_i32 = arith.constant 0 : i32
    %c0_i32_0 = arith.constant 0 : i32
    %c0_i32_1 = arith.constant 0 : i32
    return %arg1, %arg0, %c0_i32, %c0_i32_0 : i32, i32, i32, i32
  }
}

</mosaic_0001>

<llo_original>
// kernel: tpu_custom_call.1
$region0: #{tpu_custom_call.1}
  #allocation0 [shape = 'u32[]', space=smem, size = 0x4, offset = 0x4, fixed_abs, tag = 'smem constant byte address 0x4 - core index']
  #allocation1 [shape = 'u32[144,128]{1,0:T(1,128)}', space=vmem, size = 0x12000, scoped, tag = 'internal scratch']
  %s0 = inlined_call_operand.hbm [shape: f32[2,8,4,8], index: 0, kind: input, shape index: {}]
  %s1 = inlined_call_operand.hbm [shape: f32[8,1,8], index: 1, kind: input, shape index: {}]
  %s2 = inlined_call_operand.hbm [shape: f32[8,1,8], index: 2, kind: input, shape index: {}]
  %s3 = inlined_call_operand.hbm [shape: f32[2,8,4,8], index: 3, kind: output, shape index: {}]
  %s4 = sld [smem:[#allocation0]]
  $region57: #{tpu_custom_call.1} parent=0
    _
  %s6 = ssub.s32 1, %s4
  %s7 = scalar_select 0, %s6, %s4
  $region1: #{tpu_custom_call.1} parent=0
    #allocation2 [shape = 'u8[32768]{0}', space=vmem, size = 0x8000, scoped, tag = 'input window, operand 0']
    #allocation3 [shape = 's32[2]{0}', space=sflag, size = 0x8, scoped, tag = 'scoped memory for tpu_custom_call.1']
    #allocation4 [shape = 's32[2]{0}', space=sflag, size = 0x8, scoped, tag = 'scoped memory for tpu_custom_call.1']
    #allocation5 [shape = 'u8[4096]{0}', space=vmem, size = 0x1000, scoped, tag = 'input window, operand 1, single buffered']
    #allocation6 [shape = 's32[1]{0}', space=sflag, size = 0x4, scoped, tag = 'scoped memory for tpu_custom_call.1']
    #allocation7 [shape = 'u8[4096]{0}', space=vmem, size = 0x1000, scoped, tag = 'input window, operand 2, single buffered']
    #allocation8 [shape = 'u8[32768]{0}', space=vmem, size = 0x8000, scoped, tag = 'output window, operand 0']
    %8 = vsyncpa [#allocation3], 0
    %s9 = scalar_lea.sflag [#allocation3], 1
    %10 = vsyncpa %s9, 0
    %11 = vsyncpa [#allocation6], 0
    %12 = vsyncpa [#allocation4], 0
    %s13 = scalar_lea.sflag [#allocation4], 1
    %14 = vsyncpa %s13, 0
    loop: start=0, step=1, limit=4
    $region2: #{tpu_custom_call.1} parent=1 // loop_pre_header
      _
    $region3: #{tpu_custom_call.1} parent=1 // loop_header
      %s16 = sphi 0, %s20
      %p17 = scmp.ge.s32.totalorder %s16, 4
      %s23 = sphi 0, %s35
      %s24 = sphi 0, %s31
      %s25 = sphi 0, %s23
      %s26 = sphi 0, %s24
      %s27 = sphi 0, %s25
      %s28 = sphi 0, %s26
      %s40 = sphi 0, %s42
      %s43 = sphi 0, %s40
      %s44 = sphi 0, %s43
      %s60 = sphi 0, %s44
      %s66 = sphi 0, %s68
      %s69 = sphi 0, %s66
      %s70 = sphi 0, %s69
      %s86 = sphi 0, %s70
      %s92 = sphi 0, %s94
      %s95 = sphi 0, %s92
      %s96 = sphi 0, %s95
      %s112 = sphi 0, %s96
      %s120 = sphi 0, %s122
      %s123 = sphi 0, %s120
      %s124 = sphi 0, %s123
      %s140 = sphi 0, %s124
    $region4: #{tpu_custom_call.1} parent=1 // loop_header_branch
      %19 = sbr.rel (%p17) target = $region8
    $region5: #{tpu_custom_call.1} parent=1 // loop_body
      %s21 = ssub.s32 %s16, 1
      %s22 = ssub.s32 %s16, 2
      %s29 = sadd.s32 1, %s24
      %p30 = scmp.ge.s32.totalorder %s29, 2
      %s31 = scalar_select %p30, 0, %s29
      %s32 = sadd.s32 1, %s23
      %s33 = scalar_select %p30, %s32, %s23
      %p34 = scmp.ge.s32.totalorder %s33, 1
      %s35 = scalar_select %p34, 0, %s33
      %s36 = ssub.s32 %s24, %s31
      %s37 = ssub.s32 %s23, %s35
      %s38 = sor.u32 %s36, %s37
      %p39 = scmp.eq.s32.totalorder %s38, 0
      %s41 = sadd.s32 %s40, 1
      %s42 = scalar_select %p39, %s40, %s41
      %p45 = pneg %p39
      %p46 = scmp.eq.s32.totalorder %s16, 1
      %p47 = por %p45, %p46
      %p48 = scmp.ne.s32.totalorder %s40, %s43
      %p49 = scmp.eq.s32.totalorder %s16, 0
      %p50 = por %p48, %p49
      %p51 = scmp.ne.s32.totalorder %s40, %s43
      %p52 = scmp.eq.s32.totalorder %s21, 1
      %p53 = por %p51, %p52
      %p54 = scmp.ne.s32.totalorder %s43, %s44
      %p55 = scmp.eq.s32.totalorder %s21, 0
      %p56 = por %p54, %p55
      %p57 = scmp.ne.s32.totalorder %s43, %s44
      %p58 = scmp.eq.s32.totalorder %s22, 1
      %p59 = por %p57, %p58
      %p61 = scmp.ne.s32.totalorder %s44, %s60
      %p62 = scmp.eq.s32.totalorder %s22, 0
      %p63 = por %p61, %p62
      %s64 = ssub.s32 %s23, %s35
      %p65 = scmp.eq.s32.totalorder %s64, 0
      %s67 = sadd.s32 %s66, 1
      %s68 = scalar_select %p65, %s66, %s67
      %p71 = pneg %p65
      %p72 = scmp.eq.s32.totalorder %s16, 1
      %p73 = por %p71, %p72
      %p74 = scmp.ne.s32.totalorder %s66, %s69
      %p75 = scmp.eq.s32.totalorder %s16, 0
      %p76 = por %p74, %p75
      %p77 = scmp.ne.s32.totalorder %s66, %s69
      %p78 = scmp.eq.s32.totalorder %s21, 1
      %p79 = por %p77, %p78
      %p80 = scmp.ne.s32.totalorder %s69, %s70
      %p81 = scmp.eq.s32.totalorder %s21, 0
      %p82 = por %p80, %p81
      %p83 = scmp.ne.s32.totalorder %s69, %s70
      %p84 = scmp.eq.s32.totalorder %s22, 1
      %p85 = por %p83, %p84
      %p87 = scmp.ne.s32.totalorder %s70, %s86
      %p88 = scmp.eq.s32.totalorder %s22, 0
      %p89 = por %p87, %p88
      %s90 = ssub.s32 %s23, %s35
      %p91 = scmp.eq.s32.totalorder %s90, 0
      %s93 = sadd.s32 %s92, 1
      %s94 = scalar_select %p91, %s92, %s93
      %p97 = pneg %p91
      %p98 = scmp.eq.s32.totalorder %s16, 1
      %p99 = por %p97, %p98
      %p100 = scmp.ne.s32.totalorder %s92, %s95
      %p101 = scmp.eq.s32.totalorder %s16, 0
      %p102 = por %p100, %p101
      %p103 = scmp.ne.s32.totalorder %s92, %s95
      %p104 = scmp.eq.s32.totalorder %s21, 1
      %p105 = por %p103, %p104
      %p106 = scmp.ne.s32.totalorder %s95, %s96
      %p107 = scmp.eq.s32.totalorder %s21, 0
      %p108 = por %p106, %p107
      %p109 = scmp.ne.s32.totalorder %s95, %s96
      %p110 = scmp.eq.s32.totalorder %s22, 1
      %p111 = por %p109, %p110
      %p113 = scmp.ne.s32.totalorder %s96, %s112
      %p114 = scmp.eq.s32.totalorder %s22, 0
      %p115 = por %p113, %p114
      %s116 = ssub.s32 %s24, %s31
      %s117 = ssub.s32 %s23, %s35
      %s118 = sor.u32 %s116, %s117
      %p119 = scmp.eq.s32.totalorder %s118, 0
      %s121 = sadd.s32 %s120, 1
      %s122 = scalar_select %p119, %s120, %s121
      %p125 = pneg %p119
      %p126 = scmp.eq.s32.totalorder %s16, 1
      %p127 = por %p125, %p126
      %p128 = scmp.ne.s32.totalorder %s120, %s123
      %p129 = scmp.eq.s32.totalorder %s16, 0
      %p130 = por %p128, %p129
      %p131 = scmp.ne.s32.totalorder %s120, %s123
      %p132 = scmp.eq.s32.totalorder %s21, 1
      %p133 = por %p131, %p132
      %p134 = scmp.ne.s32.totalorder %s123, %s124
      %p135 = scmp.eq.s32.totalorder %s21, 0
      %p136 = por %p134, %p135
      %p137 = scmp.ne.s32.totalorder %s123, %s124
      %p138 = scmp.eq.s32.totalorder %s22, 1
      %p139 = por %p137, %p138
      %p141 = scmp.ne.s32.totalorder %s124, %s140
      %p142 = scmp.eq.s32.totalorder %s22, 0
      %p143 = por %p141, %p142
      %p144 = scmp.le.s32.totalorder 1, %s16
      %p145 = scmp.lt.s32.totalorder %s16, 3
      %p146 = pnand %p144, %p145
      %p147 = pneg %p146
      // Predicated region
      $region9: #{tpu_custom_call.1} parent=5 // pred_check
        _
      $region10: #{tpu_custom_call.1} parent=5 // pred_check_branch
        %149 = sbr.rel (%p146) target = $region12
      $region11: #{tpu_custom_call.1} parent=5 // pred_region
        %s150 = ssub.s32 %s16, 1
        // Predicated region
        $region13: #{tpu_custom_call.1} parent=11 // pred_check
          %p151 = pneg %p82
        $region14: #{tpu_custom_call.1} parent=11 // pred_check_branch
          %153 = sbr.rel (%p151) target = $region16
        $region15: #{tpu_custom_call.1} parent=11 // pred_region
          %s154 = smul.u32 8, %s25
          %s156 = ssub.s32 128, 128
          %157 = vsyncadd [#allocation6], %s156
          %s158 = smul.addr %s154, 16
          %s159 = scalar_lea.hbm %s1, %s158
          %s160 = sshll.u32 [#allocation5], 4
          %s161 = int_to_ptr.vmem [resolvable:$true] %s160
          %166 = dma.hbm_to_vmem [thread:$0]  %s159, 128, %s161, [#allocation6], 16, 16, 1
        $region16: #{tpu_custom_call.1} parent=11 // pred_fallthru
          _
        // Predicated region
        $region17: #{tpu_custom_call.1} parent=11 // pred_check
          %p167 = pneg %p108
        $region18: #{tpu_custom_call.1} parent=11 // pred_check_branch
          %169 = sbr.rel (%p167) target = $region20
        $region19: #{tpu_custom_call.1} parent=11 // pred_region
          %s170 = smul.u32 8, %s25
          %s172 = ssub.s32 128, 128
          %173 = vsyncadd [#allocation6], %s172
          %s174 = smul.addr %s170, 16
          %s175 = scalar_lea.hbm %s2, %s174
          %s176 = sshll.u32 [#allocation7], 4
          %s177 = int_to_ptr.vmem [resolvable:$true] %s176
          %182 = dma.hbm_to_vmem [thread:$0]  %s175, 128, %s177, [#allocation6], 16, 16, 1
        $region20: #{tpu_custom_call.1} parent=11 // pred_fallthru
          _
      $region12: #{tpu_custom_call.1} parent=5 // pred_fallthru
        _
      %p183 = scmp.lt.s32.totalorder %s16, 2
      // Predicated region
      $region21: #{tpu_custom_call.1} parent=5 // pred_check
        %p184 = pneg %p183
      $region22: #{tpu_custom_call.1} parent=5 // pred_check_branch
        %186 = sbr.rel (%p184) target = $region24
      $region23: #{tpu_custom_call.1} parent=5 // pred_region
        // Predicated region
        $region25: #{tpu_custom_call.1} parent=23 // pred_check
          %p187 = pneg %p50
        $region26: #{tpu_custom_call.1} parent=23 // pred_check_branch
          %189 = sbr.rel (%p187) target = $region28
        $region27: #{tpu_custom_call.1} parent=23 // pred_region
          %s190 = sand.u32 %s40, 1
          %s191 = scalar_lea.sflag [#allocation3], %s190
          %s192 = sand.u32 %s40, 1
          %s193 = smul.addr %s192, 32
          %s194 = scalar_lea.vmem [#allocation2], %s193
          %s195 = smul.u32 8, %s23
          %s197 = ssub.s32 512, 512
          %198 = vsyncadd %s191, %s197
          %s199 = smul.addr %s24, 8
          %s200 = sadd.s32 %s195, %s199
          %s201 = smul.addr %s200, 64
          %s202 = scalar_lea.hbm %s0, %s201
          %s203 = sshll.u32 %s194, 4
          %s204 = int_to_ptr.vmem [resolvable:$true] %s203
          %209 = dma.hbm_to_vmem [thread:$0]  %s202, 512, %s204, %s191, 64, 64, 4
        $region28: #{tpu_custom_call.1} parent=23 // pred_fallthru
          _
      $region24: #{tpu_custom_call.1} parent=5 // pred_fallthru
        _
      %p210 = scmp.le.s32.totalorder 1, %s16
      %p211 = scmp.lt.s32.totalorder %s16, 3
      %p212 = pnand %p210, %p211
      %p213 = pneg %p212
      // Predicated region
      $region29: #{tpu_custom_call.1} parent=5 // pred_check
        _
      $region30: #{tpu_custom_call.1} parent=5 // pred_check_branch
        %215 = sbr.rel (%p212) target = $region32
      $region31: #{tpu_custom_call.1} parent=5 // pred_region
        %s216 = ssub.s32 %s16, 1
        %s217 = sand.u32 %s43, 1
        %s218 = scalar_lea.sflag [#allocation3], %s217
        %s219 = sand.u32 %s43, 1
        %s220 = smul.addr %s219, 32
        %s221 = scalar_lea.vmem [#allocation2], %s220
        // Predicated region
        $region33: #{tpu_custom_call.1} parent=31 // pred_check
          %p222 = pneg %p56
        $region34: #{tpu_custom_call.1} parent=31 // pred_check_branch
          %224 = sbr.rel (%p222) target = $region36
        $region35: #{tpu_custom_call.1} parent=31 // pred_region
          %225 = dma.done %s218, 512
        $region36: #{tpu_custom_call.1} parent=31 // pred_fallthru
          _
        // Predicated region
        $region37: #{tpu_custom_call.1} parent=31 // pred_check
          %p226 = pneg %p82
        $region38: #{tpu_custom_call.1} parent=31 // pred_check_branch
          %228 = sbr.rel (%p226) target = $region40
        $region39: #{tpu_custom_call.1} parent=31 // pred_region
          %229 = dma.done [#allocation6], 128
        $region40: #{tpu_custom_call.1} parent=31 // pred_fallthru
          _
        // Predicated region
        $region41: #{tpu_custom_call.1} parent=31 // pred_check
          %p230 = pneg %p108
        $region42: #{tpu_custom_call.1} parent=31 // pred_check_branch
          %232 = sbr.rel (%p230) target = $region44
        $region43: #{tpu_custom_call.1} parent=31 // pred_region
          %233 = dma.done [#allocation6], 128
        $region44: #{tpu_custom_call.1} parent=31 // pred_fallthru
          _
        %s234 = sand.u32 %s43, 1
        %s235 = scalar_lea.sflag [#allocation3], %s234
        %s236 = sand.u32 %s43, 1
        %s237 = smul.addr %s236, 32
        %s238 = scalar_lea.vmem [#allocation2], %s237
        %p239 = pneg %p56
        %p240 = pneg %p53
        %p241 = pneg %p82
        %p242 = pneg %p79
        %p243 = pneg %p108
        %p244 = pneg %p105
        %p245 = pneg %p136
        %p246 = pneg %p133
        %s247 = sand.u32 %s123, 1
        %s248 = scalar_lea.sflag [#allocation4], %s247
        %s249 = sand.u32 %s123, 1
        %s250 = smul.addr %s249, 32
        %s251 = scalar_lea.vmem [#allocation8], %s250
        %s252 = smul.u32 8, %s25
        %s253 = smul.u32 8, %s25
        %s254 = smul.u32 8, %s25
        %s255 = smul.u32 8, %s25
        %v256 = vld [vmem:[%s221] sm:$0xf]
        %v257 = vld [vmem:[%s221 + $0x4] sm:$0xf]
        %v258 = vld [vmem:[%s221 + $0x8] sm:$0xf]
        %v259 = vld [vmem:[%s221 + $0xc] sm:$0xf]
        %v260 = vld [vmem:[%s221 + $0x10] sm:$0xf]
        %v261 = vld [vmem:[%s221 + $0x14] sm:$0xf]
        %v262 = vld [vmem:[%s221 + $0x18] sm:$0xf]
        %v263 = vld [vmem:[%s221 + $0x1c] sm:$0xf]
        %272 = vrot.lane.b32.xlu0 %v256, 124
        %v273 = vpop.permute.xlu0 %272
        %274 = vrot.lane.b32.xlu0 %v257, 124
        %v275 = vpop.permute.xlu0 %274
        %276 = vrot.lane.b32.xlu0 %v258, 124
        %v277 = vpop.permute.xlu0 %276
        %278 = vrot.lane.b32.xlu0 %v259, 124
        %v279 = vpop.permute.xlu0 %278
        %280 = vrot.lane.b32.xlu0 %v260, 124
        %v281 = vpop.permute.xlu0 %280
        %282 = vrot.lane.b32.xlu0 %v261, 124
        %v283 = vpop.permute.xlu0 %282
        %284 = vrot.lane.b32.xlu0 %v262, 124
        %v285 = vpop.permute.xlu0 %284
        %286 = vrot.lane.b32.xlu0 %v263, 124
        %v287 = vpop.permute.xlu0 %286
        %296 = vrot.lane.b32.xlu0 %v256, 4
        %v297 = vpop.permute.xlu0 %296
        %298 = vrot.lane.b32.xlu0 %v257, 4
        %v299 = vpop.permute.xlu0 %298
        %300 = vrot.lane.b32.xlu0 %v258, 4
        %v301 = vpop.permute.xlu0 %300
        %302 = vrot.lane.b32.xlu0 %v259, 4
        %v303 = vpop.permute.xlu0 %302
        %304 = vrot.lane.b32.xlu0 %v260, 4
        %v305 = vpop.permute.xlu0 %304
        %306 = vrot.lane.b32.xlu0 %v261, 4
        %v307 = vpop.permute.xlu0 %306
        %308 = vrot.lane.b32.xlu0 %v262, 4
        %v309 = vpop.permute.xlu0 %308
        %310 = vrot.lane.b32.xlu0 %v263, 4
        %v311 = vpop.permute.xlu0 %310
        %vm320 = vcmask 31744
        %v321 = vsel %vm320, %v273, %v297
        %v322 = vsel %vm320, %v275, %v299
        %v323 = vsel %vm320, %v277, %v301
        %v324 = vsel %vm320, %v279, %v303
        %v325 = vsel %vm320, %v281, %v305
        %v326 = vsel %vm320, %v283, %v307
        %v327 = vsel %vm320, %v285, %v309
        %v328 = vsel %vm320, %v287, %v311
        %v329 = vld [vmem:[#allocation5] sm:$0x1]
        %v330 = vld [vmem:[#allocation5 + $0x1] sm:$0x1]
        %v331 = vld [vmem:[#allocation5 + $0x2] sm:$0x1]
        %v332 = vld [vmem:[#allocation5 + $0x3] sm:$0x1]
        %v333 = vld [vmem:[#allocation5 + $0x4] sm:$0x1]
        %v334 = vld [vmem:[#allocation5 + $0x5] sm:$0x1]
        %v335 = vld [vmem:[#allocation5 + $0x6] sm:$0x1]
        %v336 = vld [vmem:[#allocation5 + $0x7] sm:$0x1]
        %v345 = vlaneseq
        %v346 = vshrl.u32 %v345, 7
        %v347 = vsub.s32 0, %v346
        %v348 = vrot.slane %v329, %v347
        %v349 = vlaneseq
        %v350 = vshrl.u32 %v349, 7
        %v351 = vsub.s32 0, %v350
        %v352 = vrot.slane %v330, %v351
        %v353 = vlaneseq
        %v354 = vshrl.u32 %v353, 7
        %v355 = vsub.s32 0, %v354
        %v356 = vrot.slane %v331, %v355
        %v357 = vlaneseq
        %v358 = vshrl.u32 %v357, 7
        %v359 = vsub.s32 0, %v358
        %v360 = vrot.slane %v332, %v359
        %v361 = vlaneseq
        %v362 = vshrl.u32 %v361, 7
        %v363 = vsub.s32 0, %v362
        %v364 = vrot.slane %v333, %v363
        %v365 = vlaneseq
        %v366 = vshrl.u32 %v365, 7
        %v367 = vsub.s32 0, %v366
        %v368 = vrot.slane %v334, %v367
        %v369 = vlaneseq
        %v370 = vshrl.u32 %v369, 7
        %v371 = vsub.s32 0, %v370
        %v372 = vrot.slane %v335, %v371
        %v373 = vlaneseq
        %v374 = vshrl.u32 %v373, 7
        %v375 = vsub.s32 0, %v374
        %v376 = vrot.slane %v336, %v375
        %v385 = vmul.f32 %v256, %v348
        %v386 = vmul.f32 %v257, %v352
        %v387 = vmul.f32 %v258, %v356
        %v388 = vmul.f32 %v259, %v360
        %v389 = vmul.f32 %v260, %v364
        %v390 = vmul.f32 %v261, %v368
        %v391 = vmul.f32 %v262, %v372
        %v392 = vmul.f32 %v263, %v376
        %v393 = vld [vmem:[#allocation7] sm:$0x1]
        %v394 = vld [vmem:[#allocation7 + $0x1] sm:$0x1]
        %v395 = vld [vmem:[#allocation7 + $0x2] sm:$0x1]
        %v396 = vld [vmem:[#allocation7 + $0x3] sm:$0x1]
        %v397 = vld [vmem:[#allocation7 + $0x4] sm:$0x1]
        %v398 = vld [vmem:[#allocation7 + $0x5] sm:$0x1]
        %v399 = vld [vmem:[#allocation7 + $0x6] sm:$0x1]
        %v400 = vld [vmem:[#allocation7 + $0x7] sm:$0x1]
        %v409 = vlaneseq
        %v410 = vshrl.u32 %v409, 7
        %v411 = vsub.s32 0, %v410
        %v412 = vrot.slane %v393, %v411
        %v413 = vlaneseq
        %v414 = vshrl.u32 %v413, 7
        %v415 = vsub.s32 0, %v414
        %v416 = vrot.slane %v394, %v415
        %v417 = vlaneseq
        %v418 = vshrl.u32 %v417, 7
        %v419 = vsub.s32 0, %v418
        %v420 = vrot.slane %v395, %v419
        %v421 = vlaneseq
        %v422 = vshrl.u32 %v421, 7
        %v423 = vsub.s32 0, %v422
        %v424 = vrot.slane %v396, %v423
        %v425 = vlaneseq
        %v426 = vshrl.u32 %v425, 7
        %v427 = vsub.s32 0, %v426
        %v428 = vrot.slane %v397, %v427
        %v429 = vlaneseq
        %v430 = vshrl.u32 %v429, 7
        %v431 = vsub.s32 0, %v430
        %v432 = vrot.slane %v398, %v431
        %v433 = vlaneseq
        %v434 = vshrl.u32 %v433, 7
        %v435 = vsub.s32 0, %v434
        %v436 = vrot.slane %v399, %v435
        %v437 = vlaneseq
        %v438 = vshrl.u32 %v437, 7
        %v439 = vsub.s32 0, %v438
        %v440 = vrot.slane %v400, %v439
        %v449 = vmul.f32 %v321, %v412
        %v450 = vmul.f32 %v322, %v416
        %v451 = vmul.f32 %v323, %v420
        %v452 = vmul.f32 %v324, %v424
        %v453 = vmul.f32 %v325, %v428
        %v454 = vmul.f32 %v326, %v432
        %v455 = vmul.f32 %v327, %v436
        %v456 = vmul.f32 %v328, %v440
        %v457 = vadd.f32 %v385, %v449
        %v458 = vadd.f32 %v386, %v450
        %v459 = vadd.f32 %v387, %v451
        %v460 = vadd.f32 %v388, %v452
        %v461 = vadd.f32 %v389, %v453
        %v462 = vadd.f32 %v390, %v454
        %v463 = vadd.f32 %v391, %v455
        %v464 = vadd.f32 %v392, %v456
        %vm465 = vcmask 60416
        %466 = vst.msk [vmem:[%s251] sm:$0xf] %vm465, %v457
        %467 = vst.msk [vmem:[%s251 + $0x4] sm:$0xf] %vm465, %v458
        %468 = vst.msk [vmem:[%s251 + $0x8] sm:$0xf] %vm465, %v459
        %469 = vst.msk [vmem:[%s251 + $0xc] sm:$0xf] %vm465, %v460
        %470 = vst.msk [vmem:[%s251 + $0x10] sm:$0xf] %vm465, %v461
        %471 = vst.msk [vmem:[%s251 + $0x14] sm:$0xf] %vm465, %v462
        %472 = vst.msk [vmem:[%s251 + $0x18] sm:$0xf] %vm465, %v463
        %473 = vst.msk [vmem:[%s251 + $0x1c] sm:$0xf] %vm465, %v464
        %s474 = sand.u32 %s123, 1
        %s475 = scalar_lea.sflag [#allocation4], %s474
        %s476 = sand.u32 %s123, 1
        %s477 = smul.addr %s476, 32
        %s478 = scalar_lea.vmem [#allocation8], %s477
        // Predicated region
        $region45: #{tpu_custom_call.1} parent=31 // pred_check
          %p479 = pneg %p133
        $region46: #{tpu_custom_call.1} parent=31 // pred_check_branch
          %481 = sbr.rel (%p479) target = $region48
        $region47: #{tpu_custom_call.1} parent=31 // pred_region
          %s482 = smul.u32 8, %s25
          %s484 = ssub.s32 512, 512
          %485 = vsyncadd %s475, %s484
          %s486 = smul.addr %s26, 8
          %s487 = sadd.s32 %s482, %s486
          %s488 = smul.addr %s487, 64
          %s489 = scalar_lea.hbm %s3, %s488
          %s490 = sshll.u32 %s478, 4
          %s491 = int_to_ptr.vmem [resolvable:$true] %s490
          %496 = dma.vmem_to_hbm [thread:$0]  %s491, 512, %s489, %s475, 64, 64, 4
        $region48: #{tpu_custom_call.1} parent=31 // pred_fallthru
          _
      $region32: #{tpu_custom_call.1} parent=5 // pred_fallthru
        _
      %p497 = scmp.le.s32.totalorder 2, %s16
      // Predicated region
      $region49: #{tpu_custom_call.1} parent=5 // pred_check
        %p498 = pneg %p497
      $region50: #{tpu_custom_call.1} parent=5 // pred_check_branch
        %500 = sbr.rel (%p498) target = $region52
      $region51: #{tpu_custom_call.1} parent=5 // pred_region
        %s501 = ssub.s32 %s16, 2
        // Predicated region
        $region53: #{tpu_custom_call.1} parent=51 // pred_check
          %p502 = pneg %p139
        $region54: #{tpu_custom_call.1} parent=51 // pred_check_branch
          %504 = sbr.rel (%p502) target = $region56
        $region55: #{tpu_custom_call.1} parent=51 // pred_region
          %s505 = sand.u32 %s124, 1
          %s506 = scalar_lea.sflag [#allocation4], %s505
          %s507 = sand.u32 %s124, 1
          %s508 = smul.addr %s507, 32
          %s509 = scalar_lea.vmem [#allocation8], %s508
          %510 = dma.done %s506, 512
        $region56: #{tpu_custom_call.1} parent=51 // pred_fallthru
          _
      $region52: #{tpu_custom_call.1} parent=5 // pred_fallthru
        _
    $region6: #{tpu_custom_call.1} parent=1 // loop_footer
      %s20 = sadd.s32 1, %s16
    $region7: #{tpu_custom_call.1} parent=1 // loop_footer_branch
      %15 = sbr.rel target = $region3
    $region8: #{tpu_custom_call.1} parent=1 // loop_exit
      _
    %511 = vsyncpa [#allocation3], 1
    %s512 = scalar_lea.sflag [#allocation3], 1
    %513 = vsyncpa %s512, 1
    %514 = vsyncpa [#allocation6], 1
    %515 = vsyncpa [#allocation4], 1
    %s516 = scalar_lea.sflag [#allocation4], 1
    %517 = vsyncpa %s516, 1

</llo_original>
